<compile_context>
chip_gen: v6e
topology: v6e:2x2x1
jax: 0.10.0
libtpu: 0.0.40
codegen_flags: <defaults>
</compile_context>

<pallas_src>
import math

import jax
import jax.numpy as jnp
import numpy as np
from jax.experimental import pallas as pl
from jax.experimental.pallas import tpu as pltpu

_NEG_BIG = -1e30     # finite "-inf" so the online-LSE never sees inf-inf
_EPS = 1e-24         # added inside rsqrt (matches torch's 1e-12 norm floor)


def _round_up(x, m):
    return ((x + m - 1) // m) * m


def _make_kernel(*, cos_m, sin_m, th, mm, scale, b_true, c_true, b_tile, c_tile):
    cos_m = float(cos_m)
    sin_m = float(sin_m)
    th = float(th)
    mm = float(mm)
    scale = float(scale)

    def kernel(x_ref, w_ref, lab_ref, o_ref, xn_ref, m_ref, l_ref, t_ref):
        b = pl.program_id(0)
        c = pl.program_id(1)
        num_c = pl.num_programs(1)

        # ---- once per batch tile: normalize x into scratch, reset accumulators ----
        @pl.when(c == 0)
        def _init():
            xv = x_ref[...].astype(jnp.float32)                       # (b_tile, D_pad)
            inv_x = jax.lax.rsqrt(jnp.sum(xv * xv, axis=-1, keepdims=True) + _EPS)
            xn_ref[...] = (xv * inv_x).astype(xn_ref.dtype)
            m_ref[...] = jnp.full_like(m_ref, _NEG_BIG)
            l_ref[...] = jnp.zeros_like(l_ref)
            t_ref[...] = jnp.zeros_like(t_ref)

        # ---- weight tile (D_pad, c_tile); fold per-class inverse norm into logits ----
        w = w_ref[...]
        wf = w.astype(jnp.float32)
        inv_wn = jax.lax.rsqrt(jnp.sum(wf * wf, axis=0, keepdims=True) + _EPS)

        cosine = jnp.dot(xn_ref[...], w, preferred_element_type=jnp.float32)
        cosine = cosine * inv_wn                                      # (b_tile, c_tile)

        # ---- additive angular margin ----
        sine = jnp.sqrt(jnp.clip(1.0 - cosine * cosine, 0.0, 1.0))
        phi = cosine * cos_m - sine * sin_m
        phi = jnp.where(cosine - th > 0.0, phi, cosine - mm)

        lab = lab_ref[...]                                            # (b_tile, 1) i32
        class_ids = c * c_tile + jax.lax.broadcasted_iota(
            jnp.int32, (b_tile, c_tile), 1)
        is_target = class_ids == lab
        valid_cls = class_ids < c_true

        logits = jnp.where(is_target, phi, cosine) * scale
        logits = jnp.where(valid_cls, logits, _NEG_BIG)               # mask padded cls

        # ---- online log-sum-exp over class tiles ----
        m_prev = m_ref[...]
        m_new = jnp.maximum(m_prev, jnp.max(logits, axis=-1, keepdims=True))
        alpha = jnp.exp(m_prev - m_new)
        p = jnp.exp(logits - m_new)                                   # padded cls -> 0
        l_ref[...] = alpha * l_ref[...] + jnp.sum(p, axis=-1, keepdims=True)
        m_ref[...] = m_new
        t_ref[...] = t_ref[...] + jnp.sum(
            jnp.where(is_target, logits, 0.0), axis=-1, keepdims=True)

        # ---- finalize: per-row cross-entropy, zero padded rows ----
        @pl.when(c == num_c - 1)
        def _finalize():
            lse = m_ref[...] + jnp.log(l_ref[...])
            per_row = lse - t_ref[...]
            row_ids = b * b_tile + jax.lax.broadcasted_iota(
                jnp.int32, (b_tile, 1), 0)
            o_ref[...] = jnp.where(row_ids < b_true, per_row, 0.0)

    return kernel


def aam_softmax_loss(x, weight, label, margin=0.2, scale=30,
                     matmul_dtype=jnp.float32, c_tile=None,
                     vmem_limit_bytes=32 * 1024 * 1024):
    """x: (B, D) f32, weight: (C, D) f32, label: (B,) int -> scalar loss."""
    B, D = x.shape
    C, D2 = weight.shape
    assert D == D2

    cos_m = math.cos(margin)
    sin_m = math.sin(margin)
    th = math.cos(math.pi - margin)
    mm = math.sin(math.pi - margin) * margin

    # --- lane-dense padding: D, C -> multiples of 128; B -> multiple of 8 ---
    D_pad = _round_up(D, 128)
    B_tile = min(_round_up(B, 8), 128)
    B_pad = _round_up(B, B_tile)

    itemsize = jnp.dtype(matmul_dtype).itemsize
    C_pad128 = _round_up(C, 128)
    if c_tile is not None:
        C_tile = min(C_pad128, _round_up(int(c_tile), 128))
    else:
        # largest class tile whose double-buffered weight stream fits a budget
        # that is safe on v7x (64 MiB physical VMEM) as well as v5e/v6e.
        weight_budget = 10 * 1024 * 1024
        c_tile_max = max(128, (weight_budget // (2 * D_pad * itemsize)) // 128 * 128)
        C_tile = min(C_pad128, c_tile_max)
    C_pad = _round_up(C_pad128, C_tile)

    x_p = jnp.zeros((B_pad, D_pad), jnp.float32).at[:B, :D].set(
        x.astype(jnp.float32))
    # pre-transposed (D, C) weight, streamed in matmul_dtype (bf16 halves HBM DMA)
    w_t = jnp.zeros((D_pad, C_pad), jnp.float32).at[:D, :C].set(
        weight.astype(jnp.float32).T).astype(matmul_dtype)
    lab_p = jnp.zeros((B_pad, 1), jnp.int32).at[:B, 0].set(label.astype(jnp.int32))

    kernel = _make_kernel(cos_m=cos_m, sin_m=sin_m, th=th, mm=mm, scale=scale,
                          b_true=B, c_true=C, b_tile=B_tile, c_tile=C_tile)

    grid = (B_pad // B_tile, C_pad // C_tile)

    per_row = pl.pallas_call(
        kernel,
        out_shape=jax.ShapeDtypeStruct((B_pad, 1), jnp.float32),
        grid_spec=pltpu.PrefetchScalarGridSpec(
            num_scalar_prefetch=0,
            grid=grid,
            in_specs=[
                pl.BlockSpec((B_tile, D_pad), lambda b, c: (b, 0)),   # x resident over c
                pl.BlockSpec((D_pad, C_tile), lambda b, c: (0, c)),   # weight stream
                pl.BlockSpec((B_tile, 1), lambda b, c: (b, 0)),       # labels
            ],
            out_specs=pl.BlockSpec((B_tile, 1), lambda b, c: (b, 0)),
            scratch_shapes=[
                pltpu.VMEM((B_tile, D_pad), matmul_dtype),            # normalized x
                pltpu.VMEM((B_tile, 1), jnp.float32),                 # running max m
                pltpu.VMEM((B_tile, 1), jnp.float32),                 # running sum l
                pltpu.VMEM((B_tile, 1), jnp.float32),                 # target logit
            ]),
        compiler_params=pltpu.CompilerParams(
            dimension_semantics=("parallel", "arbitrary"),
            vmem_limit_bytes=vmem_limit_bytes),
    )(x_p, w_t, lab_p)

    return jnp.sum(per_row) / B


def _reference_loss(x, weight, label, margin=0.2, scale=30, matmul_dtype=None):
    """Pure-JAX mirror of the PyTorch AAMsoftmax forward.

    If matmul_dtype is set, mirrors the kernel's reduced-precision streaming (the
    raw weight is rounded to that dtype; its norm is computed from the rounded
    values and folded into the logits after the f32-accumulating matmul)."""
    cos_m = math.cos(margin)
    sin_m = math.sin(margin)
    th = math.cos(math.pi - margin)
    mm = math.sin(math.pi - margin) * margin
    if matmul_dtype is None:
        xn = x / jnp.maximum(jnp.linalg.norm(x, axis=-1, keepdims=True), 1e-12)
        wn = weight / jnp.maximum(
            jnp.linalg.norm(weight, axis=-1, keepdims=True), 1e-12)
        cosine = xn @ wn.T
    else:
        xn = x * jax.lax.rsqrt(jnp.sum(x * x, axis=-1, keepdims=True) + _EPS)
        xn = xn.astype(matmul_dtype).astype(jnp.float32)
        w_r = weight.astype(matmul_dtype).astype(jnp.float32)
        inv_wn = jax.lax.rsqrt(jnp.sum(w_r * w_r, axis=-1) + _EPS)
        cosine = (xn @ w_r.T) * inv_wn[None, :]
    sine = jnp.sqrt(jnp.clip(1.0 - cosine * cosine, 0.0, 1.0))
    phi = cosine * cos_m - sine * sin_m
    phi = jnp.where(cosine - th > 0.0, phi, cosine - mm)
    one_hot = jax.nn.one_hot(label, weight.shape[0], dtype=jnp.float32)
    output = (one_hot * phi + (1.0 - one_hot) * cosine) * scale
    logp = jax.nn.log_softmax(output, axis=-1)
    return -jnp.mean(jnp.take_along_axis(logp, label[:, None], axis=1))


if __name__ == "__main__":
    margin, scale = 0.2, 30

    # --- test 1: f32 path, small shapes consistent with the module ---
    B, D, C = 8, 32, 16
    kx, kw, kl = jax.random.split(jax.random.PRNGKey(0), 3)
    x = jax.random.normal(kx, (B, D), dtype=jnp.float32)
    std = math.sqrt(2.0 / (C + D))                      # xavier_normal_(gain=1)
    weight = jax.random.normal(kw, (C, D), dtype=jnp.float32) * std
    label = jax.random.randint(kl, (B,), 0, C, dtype=jnp.int32)

    loss = jax.block_until_ready(
        aam_softmax_loss(x, weight, label, margin=margin, scale=scale))
    ref = _reference_loss(x, weight, label, margin=margin, scale=scale)
    np.testing.assert_allclose(np.asarray(loss), np.asarray(ref),
                               rtol=1e-4, atol=1e-4)

    # --- test 2: bf16 weight streaming (halves weight HBM DMA, native bf16 MXU) ---
    loss_bf16 = jax.block_until_ready(
        aam_softmax_loss(x, weight, label, margin=margin, scale=scale,
                         matmul_dtype=jnp.bfloat16))
    ref_bf16 = _reference_loss(x, weight, label, margin=margin, scale=scale,
                               matmul_dtype=jnp.bfloat16)
    np.testing.assert_allclose(np.asarray(loss_bf16), np.asarray(ref_bf16),
                               rtol=5e-3, atol=5e-3)

    # --- test 3: padded batch rows + multiple class tiles (online LSE path) ---
    B2, D2, C2 = 5, 32, 300
    kx2, kw2, kl2 = jax.random.split(jax.random.PRNGKey(1), 3)
    x2 = jax.random.normal(kx2, (B2, D2), dtype=jnp.float32)
    w2 = jax.random.normal(kw2, (C2, D2), dtype=jnp.float32) * math.sqrt(2.0 / (C2 + D2))
    lab2 = jax.random.randint(kl2, (B2,), 0, C2, dtype=jnp.int32)
    loss2 = jax.block_until_ready(
        aam_softmax_loss(x2, w2, lab2, margin=margin, scale=scale, c_tile=128))
    ref2 = _reference_loss(x2, w2, lab2, margin=margin, scale=scale)
    np.testing.assert_allclose(np.asarray(loss2), np.asarray(ref2),
                               rtol=1e-4, atol=1e-4)

    print("KERNEL_OK")
</pallas_src>

<mosaic_0001>
module attributes {stable_mosaic.version = 11 : i64} {
  func.func @kernel(%arg0: i32, %arg1: i32, %arg2: memref<8x128xf32, #tpu.memory_space<vmem>>, %arg3: memref<128x128xf32, #tpu.memory_space<vmem>>, %arg4: memref<8x1xi32, #tpu.memory_space<vmem>>, %arg5: memref<8x1xf32, #tpu.memory_space<vmem>>, %arg6: memref<8x128xf32, #tpu.memory_space<vmem>>, %arg7: memref<8x1xf32, #tpu.memory_space<vmem>>, %arg8: memref<8x1xf32, #tpu.memory_space<vmem>>, %arg9: memref<8x1xf32, #tpu.memory_space<vmem>>) attributes {dimension_semantics = [#tpu.dimension_semantics<parallel>, #tpu.dimension_semantics<arbitrary>], iteration_bounds = array<i64: 1, 1>, scalar_prefetch = 0 : i64, scratch_operands = 4 : i64, tpu.core_type = #tpu.core_type<tc>, window_params = [{transform_indices = @transform_0, window_bounds = array<i64: 8, 128>}, {transform_indices = @transform_1, window_bounds = array<i64: 128, 128>}, {transform_indices = @transform_2, window_bounds = array<i64: 8, 1>}, {transform_indices = @transform_3, window_bounds = array<i64: 8, 1>}]} {
    %c0_i32 = arith.constant 0 : i32
    %0 = arith.cmpi eq, %arg1, %c0_i32 : i32
    %1 = arith.extui %0 : i1 to i32
    %c0_i32_0 = arith.constant 0 : i32
    %2 = arith.cmpi ne, %1, %c0_i32_0 : i32
    scf.if %2 {
      %c0_36 = arith.constant 0 : index
      %c0_37 = arith.constant 0 : index
      %74 = vector.load %arg2[%c0_36, %c0_37] : memref<8x128xf32, #tpu.memory_space<vmem>>, vector<8x128xf32>
      %75 = arith.mulf %74, %74 : vector<8x128xf32>
      %cst_38 = arith.constant dense<0.000000e+00> : vector<8xf32>
      %76 = vector.multi_reduction <add>, %75, %cst_38 [1] : vector<8x128xf32> to vector<8xf32>
      %77 = vector.shape_cast %76 : vector<8xf32> to vector<8x1xf32>
      %cst_39 = arith.constant 1.000000e-24 : f32
      %78 = vector.broadcast %cst_39 : f32 to vector<8x1xf32>
      %79 = arith.addf %77, %78 : vector<8x1xf32>
      %80 = math.rsqrt %79 : vector<8x1xf32>
      %81 = vector.broadcast %80 : vector<8x1xf32> to vector<8x128xf32>
      %82 = arith.mulf %74, %81 : vector<8x128xf32>
      %c0_40 = arith.constant 0 : index
      %c0_41 = arith.constant 0 : index
      %83 = vector.load %arg6[%c0_40, %c0_41] : memref<8x128xf32, #tpu.memory_space<vmem>>, vector<8x128xf32>
      tpu.vector_store %arg6[%c0_40, %c0_41], %82 {strides = array<i32>} : memref<8x128xf32, #tpu.memory_space<vmem>>, vector<8x128xf32>,
      %cst_42 = arith.constant -1.000000e+30 : f32
      %84 = vector.broadcast %cst_42 : f32 to vector<8x1xf32>
      %c0_43 = arith.constant 0 : index
      %c0_44 = arith.constant 0 : index
      %85 = vector.load %arg7[%c0_43, %c0_44] : memref<8x1xf32, #tpu.memory_space<vmem>>, vector<8x1xf32>
      tpu.vector_store %arg7[%c0_43, %c0_44], %84 {strides = array<i32>} : memref<8x1xf32, #tpu.memory_space<vmem>>, vector<8x1xf32>,
      %cst_45 = arith.constant 0.000000e+00 : f32
      %86 = vector.broadcast %cst_45 : f32 to vector<8x1xf32>
      %c0_46 = arith.constant 0 : index
      %c0_47 = arith.constant 0 : index
      %87 = vector.load %arg8[%c0_46, %c0_47] : memref<8x1xf32, #tpu.memory_space<vmem>>, vector<8x1xf32>
      tpu.vector_store %arg8[%c0_46, %c0_47], %86 {strides = array<i32>} : memref<8x1xf32, #tpu.memory_space<vmem>>, vector<8x1xf32>,
      %cst_48 = arith.constant 0.000000e+00 : f32
      %88 = vector.broadcast %cst_48 : f32 to vector<8x1xf32>
      %c0_49 = arith.constant 0 : index
      %c0_50 = arith.constant 0 : index
      %89 = vector.load %arg9[%c0_49, %c0_50] : memref<8x1xf32, #tpu.memory_space<vmem>>, vector<8x1xf32>
      tpu.vector_store %arg9[%c0_49, %c0_50], %88 {strides = array<i32>} : memref<8x1xf32, #tpu.memory_space<vmem>>, vector<8x1xf32>,
    } else {
    }
    %c0 = arith.constant 0 : index
    %c0_1 = arith.constant 0 : index
    %3 = vector.load %arg3[%c0, %c0_1] : memref<128x128xf32, #tpu.memory_space<vmem>>, vector<128x128xf32>
    %4 = arith.mulf %3, %3 : vector<128x128xf32>
    %cst = arith.constant dense<0.000000e+00> : vector<128xf32>
    %5 = vector.multi_reduction <add>, %4, %cst [0] : vector<128x128xf32> to vector<128xf32>
    %6 = vector.shape_cast %5 : vector<128xf32> to vector<1x128xf32>
    %cst_2 = arith.constant 1.000000e-24 : f32
    %7 = vector.broadcast %cst_2 : f32 to vector<1x128xf32>
    %8 = arith.addf %6, %7 : vector<1x128xf32>
    %9 = math.rsqrt %8 : vector<1x128xf32>
    %c0_3 = arith.constant 0 : index
    %c0_4 = arith.constant 0 : index
    %10 = vector.load %arg6[%c0_3, %c0_4] : memref<8x128xf32, #tpu.memory_space<vmem>>, vector<8x128xf32>
    %cst_5 = arith.constant dense<0.000000e+00> : vector<8x128xf32>
    %11 = tpu.matmul %10, %3, %cst_5 {dimension_numbers = #tpu.dot_dimension_numbers<[1], [0], [0], [1], [0, 0, 1, 1], [], []>} : vector<8x128xf32>, vector<128x128xf32>, vector<8x128xf32> -> vector<8x128xf32>
    %12 = vector.broadcast %9 : vector<1x128xf32> to vector<8x128xf32>
    %13 = arith.mulf %11, %12 : vector<8x128xf32>
    %14 = arith.mulf %13, %13 : vector<8x128xf32>
    %cst_6 = arith.constant 1.000000e+00 : f32
    %15 = vector.broadcast %cst_6 : f32 to vector<8x128xf32>
    %16 = arith.subf %15, %14 : vector<8x128xf32>
    %cst_7 = arith.constant 0.000000e+00 : f32
    %cst_8 = arith.constant 1.000000e+00 : f32
    %17 = vector.broadcast %cst_7 : f32 to vector<8x128xf32>
    %18 = arith.maximumf %17, %16 : vector<8x128xf32>
    %19 = vector.broadcast %cst_8 : f32 to vector<8x128xf32>
    %20 = arith.minimumf %19, %18 : vector<8x128xf32>
    %21 = math.sqrt %20 : vector<8x128xf32>
    %cst_9 = arith.constant 0.980066597 : f32
    %22 = vector.broadcast %cst_9 : f32 to vector<8x128xf32>
    %23 = arith.mulf %13, %22 : vector<8x128xf32>
    %cst_10 = arith.constant 0.198669329 : f32
    %24 = vector.broadcast %cst_10 : f32 to vector<8x128xf32>
    %25 = arith.mulf %21, %24 : vector<8x128xf32>
    %26 = arith.subf %23, %25 : vector<8x128xf32>
    %cst_11 = arith.constant -0.980066597 : f32
    %27 = vector.broadcast %cst_11 : f32 to vector<8x128xf32>
    %28 = arith.subf %13, %27 : vector<8x128xf32>
    %cst_12 = arith.constant 0.000000e+00 : f32
    %29 = vector.broadcast %cst_12 : f32 to vector<8x128xf32>
    %30 = arith.cmpf ogt, %28, %29 : vector<8x128xf32>
    %cst_13 = arith.constant 0.0397338644 : f32
    %31 = vector.broadcast %cst_13 : f32 to vector<8x128xf32>
    %32 = arith.subf %13, %31 : vector<8x128xf32>
    %33 = arith.select %30, %26, %32 : vector<8x128xi1>, vector<8x128xf32>
    %c0_14 = arith.constant 0 : index
    %c0_15 = arith.constant 0 : index
    %34 = vector.load %arg4[%c0_14, %c0_15] : memref<8x1xi32, #tpu.memory_space<vmem>>, vector<8x1xi32>
    %c128_i32 = arith.constant 128 : i32
    %35 = arith.muli %arg1, %c128_i32 : i32
    %36 = tpu.iota {dimensions = array<i32: 1>} : vector<8x128xi32>
    %37 = vector.broadcast %35 : i32 to vector<8x128xi32>
    %38 = arith.addi %37, %36 : vector<8x128xi32>
    %39 = vector.broadcast %34 : vector<8x1xi32> to vector<8x128xi32>
    %40 = arith.cmpi eq, %38, %39 : vector<8x128xi32>
    %c16_i32 = arith.constant 16 : i32
    %41 = vector.broadcast %c16_i32 : i32 to vector<8x128xi32>
    %42 = arith.cmpi slt, %38, %41 : vector<8x128xi32>
    %43 = arith.select %40, %33, %13 : vector<8x128xi1>, vector<8x128xf32>
    %cst_16 = arith.constant 3.000000e+01 : f32
    %44 = vector.broadcast %cst_16 : f32 to vector<8x128xf32>
    %45 = arith.mulf %43, %44 : vector<8x128xf32>
    %cst_17 = arith.constant -1.000000e+30 : f32
    %46 = vector.broadcast %cst_17 : f32 to vector<8x128xf32>
    %47 = arith.select %42, %45, %46 : vector<8x128xi1>, vector<8x128xf32>
    %c0_18 = arith.constant 0 : index
    %c0_19 = arith.constant 0 : index
    %48 = vector.load %arg7[%c0_18, %c0_19] : memref<8x1xf32, #tpu.memory_space<vmem>>, vector<8x1xf32>
    %cst_20 = arith.constant dense<0xFF800000> : vector<8xf32>
    %49 = vector.multi_reduction <maximumf>, %47, %cst_20 [1] : vector<8x128xf32> to vector<8xf32>
    %50 = vector.shape_cast %49 : vector<8xf32> to vector<8x1xf32>
    %51 = arith.maximumf %48, %50 : vector<8x1xf32>
    %52 = arith.subf %48, %51 : vector<8x1xf32>
    %53 = math.exp %52 : vector<8x1xf32>
    %54 = vector.broadcast %51 : vector<8x1xf32> to vector<8x128xf32>
    %55 = arith.subf %47, %54 : vector<8x128xf32>
    %56 = math.exp %55 : vector<8x128xf32>
    %c0_21 = arith.constant 0 : index
    %c0_22 = arith.constant 0 : index
    %57 = vector.load %arg8[%c0_21, %c0_22] : memref<8x1xf32, #tpu.memory_space<vmem>>, vector<8x1xf32>
    %58 = arith.mulf %53, %57 : vector<8x1xf32>
    %cst_23 = arith.constant dense<0.000000e+00> : vector<8xf32>
    %59 = vector.multi_reduction <add>, %56, %cst_23 [1] : vector<8x128xf32> to vector<8xf32>
    %60 = vector.shape_cast %59 : vector<8xf32> to vector<8x1xf32>
    %61 = arith.addf %58, %60 : vector<8x1xf32>
    %c0_24 = arith.constant 0 : index
    %c0_25 = arith.constant 0 : index
    %62 = vector.load %arg8[%c0_24, %c0_25] : memref<8x1xf32, #tpu.memory_space<vmem>>, vector<8x1xf32>
    tpu.vector_store %arg8[%c0_24, %c0_25], %61 {strides = array<i32>} : memref<8x1xf32, #tpu.memory_space<vmem>>, vector<8x1xf32>,
    %c0_26 = arith.constant 0 : index
    %c0_27 = arith.constant 0 : index
    %63 = vector.load %arg7[%c0_26, %c0_27] : memref<8x1xf32, #tpu.memory_space<vmem>>, vector<8x1xf32>
    tpu.vector_store %arg7[%c0_26, %c0_27], %51 {strides = array<i32>} : memref<8x1xf32, #tpu.memory_space<vmem>>, vector<8x1xf32>,
    %c0_28 = arith.constant 0 : index
    %c0_29 = arith.constant 0 : index
    %64 = vector.load %arg9[%c0_28, %c0_29] : memref<8x1xf32, #tpu.memory_space<vmem>>, vector<8x1xf32>
    %cst_30 = arith.constant 0.000000e+00 : f32
    %65 = vector.broadcast %cst_30 : f32 to vector<8x128xf32>
    %66 = arith.select %40, %47, %65 : vector<8x128xi1>, vector<8x128xf32>
    %cst_31 = arith.constant dense<0.000000e+00> : vector<8xf32>
    %67 = vector.multi_reduction <add>, %66, %cst_31 [1] : vector<8x128xf32> to vector<8xf32>
    %68 = vector.shape_cast %67 : vector<8xf32> to vector<8x1xf32>
    %69 = arith.addf %64, %68 : vector<8x1xf32>
    %c0_32 = arith.constant 0 : index
    %c0_33 = arith.constant 0 : index
    %70 = vector.load %arg9[%c0_32, %c0_33] : memref<8x1xf32, #tpu.memory_space<vmem>>, vector<8x1xf32>
    tpu.vector_store %arg9[%c0_32, %c0_33], %69 {strides = array<i32>} : memref<8x1xf32, #tpu.memory_space<vmem>>, vector<8x1xf32>,
    %c0_i32_34 = arith.constant 0 : i32
    %71 = arith.cmpi eq, %arg1, %c0_i32_34 : i32
    %72 = arith.extui %71 : i1 to i32
    %c0_i32_35 = arith.constant 0 : i32
    %73 = arith.cmpi ne, %72, %c0_i32_35 : i32
    scf.if %73 {
      %c0_36 = arith.constant 0 : index
      %c0_37 = arith.constant 0 : index
      %74 = vector.load %arg7[%c0_36, %c0_37] : memref<8x1xf32, #tpu.memory_space<vmem>>, vector<8x1xf32>
      %c0_38 = arith.constant 0 : index
      %c0_39 = arith.constant 0 : index
      %75 = vector.load %arg8[%c0_38, %c0_39] : memref<8x1xf32, #tpu.memory_space<vmem>>, vector<8x1xf32>
      %76 = math.log %75 : vector<8x1xf32>
      %77 = arith.addf %74, %76 : vector<8x1xf32>
      %c0_40 = arith.constant 0 : index
      %c0_41 = arith.constant 0 : index
      %78 = vector.load %arg9[%c0_40, %c0_41] : memref<8x1xf32, #tpu.memory_space<vmem>>, vector<8x1xf32>
      %79 = arith.subf %77, %78 : vector<8x1xf32>
      %c8_i32 = arith.constant 8 : i32
      %80 = arith.muli %arg0, %c8_i32 : i32
      %81 = tpu.iota {dimensions = array<i32: 0>} : vector<8x1xi32>
      %82 = vector.broadcast %80 : i32 to vector<8x1xi32>
      %83 = arith.addi %82, %81 : vector<8x1xi32>
      %c8_i32_42 = arith.constant 8 : i32
      %84 = vector.broadcast %c8_i32_42 : i32 to vector<8x1xi32>
      %85 = arith.cmpi slt, %83, %84 : vector<8x1xi32>
      %cst_43 = arith.constant 0.000000e+00 : f32
      %86 = vector.broadcast %cst_43 : f32 to vector<8x1xf32>
      %87 = arith.select %85, %79, %86 : vector<8x1xi1>, vector<8x1xf32>
      %c0_44 = arith.constant 0 : index
      %c0_45 = arith.constant 0 : index
      %88 = vector.load %arg5[%c0_44, %c0_45] : memref<8x1xf32, #tpu.memory_space<vmem>>, vector<8x1xf32>
      tpu.vector_store %arg5[%c0_44, %c0_45], %87 {strides = array<i32>} : memref<8x1xf32, #tpu.memory_space<vmem>>, vector<8x1xf32>,
    } else {
    }
    return
  }
  func.func @transform_0(%arg0: i32, %arg1: i32) -> (i32, i32) {
    %c0_i32 = arith.constant 0 : i32
    %c0_i32_0 = arith.constant 0 : i32
    return %arg0, %c0_i32 : i32, i32
  }
  func.func @transform_1(%arg0: i32, %arg1: i32) -> (i32, i32) {
    %c0_i32 = arith.constant 0 : i32
    %c0_i32_0 = arith.constant 0 : i32
    return %c0_i32, %arg1 : i32, i32
  }
  func.func @transform_2(%arg0: i32, %arg1: i32) -> (i32, i32) {
    %c0_i32 = arith.constant 0 : i32
    %c0_i32_0 = arith.constant 0 : i32
    return %arg0, %c0_i32 : i32, i32
  }
  func.func @transform_3(%arg0: i32, %arg1: i32) -> (i32, i32) {
    %c0_i32 = arith.constant 0 : i32
    %c0_i32_0 = arith.constant 0 : i32
    return %arg0, %c0_i32 : i32, i32
  }
}

</mosaic_0001>

<llo_original>
// kernel: tpu_custom_call.1
$region0: #{tpu_custom_call.1}
  #allocation0 [shape = 'u32[]', space=smem, size = 0x4, offset = 0x4, fixed_abs, tag = 'smem constant byte address 0x4 - core index']
  #allocation1 [shape = 'u32[144,128]{1,0:T(1,128)}', space=vmem, size = 0x12000, scoped, tag = 'internal scratch']
  #allocation2 [shape = 'f32[8,128]{1,0:T(8,128)}', space=vmem, size = 0x1000, scoped, tag = 'scratch operand']
  #allocation3 [shape = 'f32[8,1]{1,0:T(8,128)}', space=vmem, size = 0x1000, scoped, tag = 'scratch operand']
  #allocation4 [shape = 'f32[8,1]{1,0:T(8,128)}', space=vmem, size = 0x1000, scoped, tag = 'scratch operand']
  #allocation5 [shape = 'f32[8,1]{1,0:T(8,128)}', space=vmem, size = 0x1000, scoped, tag = 'scratch operand']
  %s0 = inlined_call_operand.vmem [shape: f32[8,128], index: 0, kind: input, shape index: {}]
  %s1 = inlined_call_operand.hbm [shape: f32[128,128], index: 1, kind: input, shape index: {}]
  %s2 = inlined_call_operand.vmem [shape: s32[8,1], index: 2, kind: input, shape index: {}]
  %s3 = inlined_call_operand.vmem [shape: f32[8,1], index: 3, kind: output, shape index: {}]
  %s4 = sld [smem:[#allocation0]]
  $region34: #{tpu_custom_call.1} parent=0
    _
  %s6 = ssub.s32 1, %s4
  %s7 = scalar_select 0, %s6, %s4
  $region1: #{tpu_custom_call.1} parent=0
    #allocation6 [shape = 'u8[65536]{0}', space=vmem, size = 0x10000, scoped, tag = 'input window, operand 1, single buffered']
    #allocation7 [shape = 's32[1]{0}', space=sflag, size = 0x4, scoped, tag = 'scoped memory for tpu_custom_call.1']
    %8 = vsyncpa [#allocation7], 0
    // Predicated region
    $region2: #{tpu_custom_call.1} parent=1 // pred_check
      _
    $region3: #{tpu_custom_call.1} parent=1 // pred_check_branch
      %10 = sbr.rel (0) target = $region5
    $region4: #{tpu_custom_call.1} parent=1 // pred_region
      _
    $region5: #{tpu_custom_call.1} parent=1 // pred_fallthru
      _
    // Predicated region
    $region6: #{tpu_custom_call.1} parent=1 // pred_check
      _
    $region7: #{tpu_custom_call.1} parent=1 // pred_check_branch
      %12 = sbr.rel (0) target = $region9
    $region8: #{tpu_custom_call.1} parent=1 // pred_region
      %s14 = ssub.s32 2048, 2048
      %15 = vsyncadd [#allocation7], %s14
      %s16 = sshll.u32 [#allocation6], 4
      %s17 = int_to_ptr.vmem [resolvable:$true] %s16
      %22 = dma.hbm_to_vmem [thread:$0]  %s1, 2048, %s17, [#allocation7], 128, 128, 8
    $region9: #{tpu_custom_call.1} parent=1 // pred_fallthru
      _
    // Predicated region
    $region10: #{tpu_custom_call.1} parent=1 // pred_check
      _
    $region11: #{tpu_custom_call.1} parent=1 // pred_check_branch
      %24 = sbr.rel (0) target = $region13
    $region12: #{tpu_custom_call.1} parent=1 // pred_region
      _
    $region13: #{tpu_custom_call.1} parent=1 // pred_fallthru
      _
    // Predicated region
    $region14: #{tpu_custom_call.1} parent=1 // pred_check
      _
    $region15: #{tpu_custom_call.1} parent=1 // pred_check_branch
      %26 = sbr.rel (0) target = $region17
    $region16: #{tpu_custom_call.1} parent=1 // pred_region
      %27 = dma.done [#allocation7], 2048
    $region17: #{tpu_custom_call.1} parent=1 // pred_fallthru
      _
    %p28 = scmp.eq.s32.totalorder 0, 0
    // Predicated region
    $region18: #{tpu_custom_call.1} parent=1 // pred_check
      %p29 = pneg %p28
    $region19: #{tpu_custom_call.1} parent=1 // pred_check_branch
      %31 = sbr.rel (%p29) target = $region21
    $region20: #{tpu_custom_call.1} parent=1 // pred_region
      %v32 = vld [vmem:[%s0] sm:$0xff]
      %v33 = vmul.f32 %v32, %v32
      %34 = vadd.xlane.f32.xlu0 %v33
      %v35 = vpop.xlane.xlu0 %34
      %v36 = vadd.f32 %v35, 1e-24
      %v37 = vrsqrt.pop %v36
      %v38 = vmul.f32 %v32, %v37
      %39 = vst [vmem:[#allocation2] sm:$0xff] %v38
      %vm40 = vcmask 7168
      %41 = vst.msk [vmem:[#allocation3] sm:$0xff] %vm40, -1e+30
      %42 = vst.msk [vmem:[#allocation4] sm:$0xff] %vm40, 0.0
      %43 = vst.msk [vmem:[#allocation5] sm:$0xff] %vm40, 0.0
    $region21: #{tpu_custom_call.1} parent=1 // pred_fallthru
      _
    %v44 = vld [vmem:[#allocation6] sm:$0xff]
    %v45 = vld [vmem:[#allocation6 + $0x8] sm:$0xff]
    %v46 = vld [vmem:[#allocation6 + $0x10] sm:$0xff]
    %v47 = vld [vmem:[#allocation6 + $0x18] sm:$0xff]
    %v48 = vld [vmem:[#allocation6 + $0x20] sm:$0xff]
    %v49 = vld [vmem:[#allocation6 + $0x28] sm:$0xff]
    %v50 = vld [vmem:[#allocation6 + $0x30] sm:$0xff]
    %v51 = vld [vmem:[#allocation6 + $0x38] sm:$0xff]
    %v52 = vld [vmem:[#allocation6 + $0x40] sm:$0xff]
    %v53 = vld [vmem:[#allocation6 + $0x48] sm:$0xff]
    %v54 = vld [vmem:[#allocation6 + $0x50] sm:$0xff]
    %v55 = vld [vmem:[#allocation6 + $0x58] sm:$0xff]
    %v56 = vld [vmem:[#allocation6 + $0x60] sm:$0xff]
    %v57 = vld [vmem:[#allocation6 + $0x68] sm:$0xff]
    %v58 = vld [vmem:[#allocation6 + $0x70] sm:$0xff]
    %v59 = vld [vmem:[#allocation6 + $0x78] sm:$0xff]
    %v60 = vmul.f32 %v44, %v44
    %v61 = vmul.f32 %v45, %v45
    %v62 = vmul.f32 %v46, %v46
    %v63 = vmul.f32 %v47, %v47
    %v64 = vmul.f32 %v48, %v48
    %v65 = vmul.f32 %v49, %v49
    %v66 = vmul.f32 %v50, %v50
    %v67 = vmul.f32 %v51, %v51
    %v68 = vmul.f32 %v52, %v52
    %v69 = vmul.f32 %v53, %v53
    %v70 = vmul.f32 %v54, %v54
    %v71 = vmul.f32 %v55, %v55
    %v72 = vmul.f32 %v56, %v56
    %v73 = vmul.f32 %v57, %v57
    %v74 = vmul.f32 %v58, %v58
    %v75 = vmul.f32 %v59, %v59
    %v76 = vadd.f32 %v60, %v61
    %v77 = vadd.f32 %v76, %v62
    %v78 = vadd.f32 %v77, %v63
    %v79 = vadd.f32 %v78, %v64
    %v80 = vadd.f32 %v79, %v65
    %v81 = vadd.f32 %v80, %v66
    %v82 = vadd.f32 %v81, %v67
    %v83 = vadd.f32 %v82, %v68
    %v84 = vadd.f32 %v83, %v69
    %v85 = vadd.f32 %v84, %v70
    %v86 = vadd.f32 %v85, %v71
    %v87 = vadd.f32 %v86, %v72
    %v88 = vadd.f32 %v87, %v73
    %v89 = vadd.f32 %v88, %v74
    %v90 = vadd.f32 %v89, %v75
    %v91 = vrot.slane %v90, 4
    %v92 = vadd.f32 %v90, %v91
    %v93 = vrot.slane %v92, 2
    %v94 = vadd.f32 %v92, %v93
    %v95 = vrot.slane %v94, 1
    %v96 = vadd.f32 %v94, %v95
    %v97 = vadd.f32 %v96, 1e-24
    %v98 = vrsqrt.pop %v97
    %v99 = vld [vmem:[#allocation2] sm:$0xff]
    %100 = vmatprep.subr.mxu0 0.0
    %101 = vmatpush1.msra.mxu0 %v59
    %102 = vmatprep.subr.mxu0 0.0
    %103 = vmatpush1.msra.mxu0 %v58
    %104 = vmatprep.subr.mxu0 0.0
    %105 = vmatpush1.msra.mxu0 %v57
    %106 = vmatprep.subr.mxu0 0.0
    %107 = vmatpush1.msra.mxu0 %v56
    %108 = vmatprep.subr.mxu0 0.0
    %109 = vmatpush1.msra.mxu0 %v55
    %110 = vmatprep.subr.mxu0 0.0
    %111 = vmatpush1.msra.mxu0 %v54
    %112 = vmatprep.subr.mxu0 0.0
    %113 = vmatpush1.msra.mxu0 %v53
    %114 = vmatprep.subr.mxu0 0.0
    %115 = vmatpush1.msra.mxu0 %v52
    %116 = vmatprep.subr.mxu0 0.0
    %117 = vmatpush1.msra.mxu0 %v51
    %118 = vmatprep.subr.mxu0 0.0
    %119 = vmatpush1.msra.mxu0 %v50
    %120 = vmatprep.subr.mxu0 0.0
    %121 = vmatpush1.msra.mxu0 %v49
    %122 = vmatprep.subr.mxu0 0.0
    %123 = vmatpush1.msra.mxu0 %v48
    %124 = vmatprep.subr.mxu0 0.0
    %125 = vmatpush1.msra.mxu0 %v47
    %126 = vmatprep.subr.mxu0 0.0
    %127 = vmatpush1.msra.mxu0 %v46
    %128 = vmatprep.subr.mxu0 0.0
    %129 = vmatpush1.msra.mxu0 %v45
    %130 = vmatprep.subr.mxu0 0.0
    %131 = vmatpush1.msra.mxu0 %v44
    %132 = vmatprep.subr.mxu0 0.0
    %133 = vmatpush2.msra.mxu0 0.0
    %134 = vmatprep.subr.mxu0 0.0
    %135 = vmatpush2.msra.mxu0 0.0
    %136 = vmatprep.subr.mxu0 0.0
    %137 = vmatpush2.msra.mxu0 0.0
    %138 = vmatprep.subr.mxu0 0.0
    %139 = vmatpush2.msra.mxu0 0.0
    %140 = vmatprep.subr.mxu0 0.0
    %141 = vmatpush2.msra.mxu0 0.0
    %142 = vmatprep.subr.mxu0 0.0
    %143 = vmatpush2.msra.mxu0 0.0
    %144 = vmatprep.subr.mxu0 0.0
    %145 = vmatpush2.msra.mxu0 0.0
    %146 = vmatprep.subr.mxu0 0.0
    %147 = vmatpush2.msra.mxu0 0.0
    %148 = vmatprep.subr.mxu0 0.0
    %149 = vmatpush2.msra.mxu0 0.0
    %150 = vmatprep.subr.mxu0 0.0
    %151 = vmatpush2.msra.mxu0 0.0
    %152 = vmatprep.subr.mxu0 0.0
    %153 = vmatpush2.msra.mxu0 0.0
    %154 = vmatprep.subr.mxu0 0.0
    %155 = vmatpush2.msra.mxu0 0.0
    %156 = vmatprep.subr.mxu0 0.0
    %157 = vmatpush2.msra.mxu0 0.0
    %158 = vmatprep.subr.mxu0 0.0
    %159 = vmatpush2.msra.mxu0 0.0
    %160 = vmatprep.subr.mxu0 0.0
    %161 = vmatpush2.msra.mxu0 0.0
    %162 = vmatprep.subr.mxu0 0.0
    %163 = vmatpush2.msra.mxu0 0.0
    %164 = vmatprep.mubr.f32.mxu0 0.0
    %165 = vmatmul.mubr.f32.gmra.mxu0 %v99
    %v166 = vpop.f32.mrf.mxu0
    %v167 = vadd.f32 0.0, %v166
    %v168 = vpop.f32.mrf.mxu0
    %169 = vdwg.mxu0
    %v170 = vmul.f32 %v167, %v98
    %v171 = vmul.f32 %v170, %v170
    %v172 = vsub.f32 1.0, %v171
    %v173 = vmax.f32 %v172, 0.0
    %v174 = vmin.f32 %v173, 1.0
    %v175 = vrsqrt.pop %v174
    %v176 = vmul.f32 %v174, %v175
    %vm177 = vcmp.eq.f32.partialorder %v174, inf
    %v178 = vsel %vm177, %v174, %v176
    %vm179 = vcmp.eq.f32.partialorder %v174, 0.0
    %v180 = vand.u32 %v174, 2147483648
    %v181 = vsel %vm179, %v180, %v178
    %v182 = vmul.f32 %v170, 0.9800666
    %v183 = vmul.f32 %v181, 0.19866933
    %v184 = vsub.f32 %v182, %v183
    %v185 = vsub.f32 %v170, -0.9800666
    %vm186 = vcmp.gt.f32.partialorder %v185, 0.0
    %v187 = vsub.f32 %v170, 0.039733864
    %v188 = vsel %vm186, %v184, %v187
    %v189 = vld [vmem:[%s2] sm:$0xff]
    %s190 = smul.u32 0, 128
    %v191 = vlaneseq
    %v192 = vand.u32 %v191, 127
    %v193 = vstv %s190
    %v194 = vadd.s32 %v193, %v192
    %195 = vset.pattern.permute.xlu0 0
    %196 = vperm.xlu0 %195, %v189
    %v197 = vpop.permute.xlu0 %196
    %vm198 = vcmp.eq.s32.totalorder %v194, %v197
    %vm199 = vcmp.lt.s32.totalorder %v194, 16
    %v200 = vsel %vm198, %v188, %v170
    %v201 = vmul.f32 %v200, 30.0
    %v202 = vsel %vm199, %v201, -1e+30
    %v203 = vld [vmem:[#allocation3] sm:$0xff]
    %204 = vmax.xlane.f32.xlu0 %v202
    %v205 = vpop.xlane.xlu0 %204
    %v206 = vmax.f32 %v203, %v205
    %v207 = vsub.f32 %v203, %v206
    %v208 = vmul.f32 %v207, 1.442695
    %v209 = vpow.pop %v208
    %211 = vset.pattern.permute.xlu0 0
    %212 = vperm.xlu0 %211, %v206
    %v213 = vpop.permute.xlu0 %212
    %v215 = vsub.f32 %v202, %v213
    %v216 = vmul.f32 %v215, 1.442695
    %v217 = vpow.pop %v216
    %v218 = vld [vmem:[#allocation4] sm:$0xff]
    %v219 = vmul.f32 %v209, %v218
    %220 = vadd.xlane.f32.xlu0 %v217
    %v221 = vpop.xlane.xlu0 %220
    %v222 = vadd.f32 %v219, %v221
    %vm223 = vcmask 7168
    %224 = vst.msk [vmem:[#allocation4] sm:$0xff] %vm223, %v222
    %225 = vst.msk [vmem:[#allocation3] sm:$0xff] %vm223, %v206
    %v226 = vld [vmem:[#allocation5] sm:$0xff]
    %v227 = vsel %vm198, %v202, 0.0
    %228 = vadd.xlane.f32.xlu0 %v227
    %v229 = vpop.xlane.xlu0 %228
    %v230 = vadd.f32 %v226, %v229
    %231 = vst.msk [vmem:[#allocation5] sm:$0xff] %vm223, %v230
    // Predicated region
    $region22: #{tpu_custom_call.1} parent=1 // pred_check
      %p232 = pneg %p28
    $region23: #{tpu_custom_call.1} parent=1 // pred_check_branch
      %234 = sbr.rel (%p232) target = $region25
    $region24: #{tpu_custom_call.1} parent=1 // pred_region
      %v235 = vld [vmem:[#allocation3] sm:$0xff]
      %v236 = vld [vmem:[#allocation4] sm:$0xff]
      %v237 = vlog2.pop %v236
      %v238 = vmul.f32 %v237, 0.6931472
      %v239 = vadd.f32 %v235, %v238
      %v240 = vld [vmem:[#allocation5] sm:$0xff]
      %v241 = vsub.f32 %v239, %v240
      %s242 = smul.u32 0, 8
      %v243 = vlaneseq
      %v244 = vshrl.u32 %v243, 7
      %v245 = vstv %s242
      %v246 = vadd.s32 %v245, %v244
      %vm247 = vcmp.lt.s32.totalorder %v246, 8
      %v248 = vsel %vm247, %v241, 0.0
      %249 = vst.msk [vmem:[%s3] sm:$0xff] %vm223, %v248
    $region25: #{tpu_custom_call.1} parent=1 // pred_fallthru
      _
    // Predicated region
    $region26: #{tpu_custom_call.1} parent=1 // pred_check
      _
    $region27: #{tpu_custom_call.1} parent=1 // pred_check_branch
      %251 = sbr.rel (0) target = $region29
    $region28: #{tpu_custom_call.1} parent=1 // pred_region
      _
    $region29: #{tpu_custom_call.1} parent=1 // pred_fallthru
      _
    // Predicated region
    $region30: #{tpu_custom_call.1} parent=1 // pred_check
      _
    $region31: #{tpu_custom_call.1} parent=1 // pred_check_branch
      %253 = sbr.rel (0) target = $region33
    $region32: #{tpu_custom_call.1} parent=1 // pred_region
      _
    $region33: #{tpu_custom_call.1} parent=1 // pred_fallthru
      _
    %254 = vsyncpa [#allocation7], 1

</llo_original>
